<compile_context>
chip_gen: v7x
topology: tpu7x:2x2x1
jax: 0.10.0
libtpu: 0.0.40
codegen_flags: <defaults>
</compile_context>

<pallas_src>
import functools

import jax
import jax.numpy as jnp
from jax.experimental import pallas as pl
from jax.experimental.pallas import tpu as pltpu

NEG_SLOPE = 0.01      # nn.LeakyReLU default
FILTERS = (1, 2, 3)
OUT_LANES = 128       # lane-dense output width (out_dim <= 128)


def _round_up(v, m):
    return (v + m - 1) // m * m


# ----------------------------- Pallas kernel -------------------------------
def cnn_kernel(x_ref, cw_ref, fc_ref, o_ref, xpad_ref, cols_ref, *, L, E, H):
    Lp = L + 2                       # Conv1d padding=1 on both ends
    KR = 6 * E                       # rows of block-diagonal conv weight
    NC = 3 * H                       # conv output lanes (conv0|conv1|conv2)
    ROWS = cols_ref.shape[0]         # sublane-rounded T_max

    # ---- in-kernel zero-pad + im2col into one packed cols tile ------------
    xpad_ref[...] = jnp.zeros_like(xpad_ref)
    cols_ref[...] = jnp.zeros_like(cols_ref)
    xpad_ref[1:L + 1, :] = x_ref[0]                  # (L, E) into rows 1..L

    t_sizes = []
    lane_base = 0
    for k in FILTERS:
        Tk = (Lp - k) // k + 1
        t_sizes.append(Tk)
        if k == 1:
            cols_ref[0:Tk, 0:E] = xpad_ref[0:Tk, :]          # one block copy
        else:
            for j in range(k):                               # static unroll
                lo = lane_base + j * E
                for t in range(Tk):
                    s = t * k + j
                    cols_ref[t:t + 1, lo:lo + E] = xpad_ref[s:s + 1, :]
        lane_base += k * E
    T0, T1, T2 = t_sizes

    # ---- all three convs as ONE block-diagonal MXU matmul + bias + LeakyReLU
    c = jnp.dot(cols_ref[...], cw_ref[0:KR, :],
                preferred_element_type=jnp.float32) + cw_ref[KR:KR + 1, :]
    c = jnp.maximum(c, NEG_SLOPE * c)                        # LeakyReLU

    # ---- masked adaptive max / avg pooling over the position axis ---------
    row_id = jax.lax.broadcasted_iota(jnp.int32, (ROWS, NC), 0)
    lane_id = jax.lax.broadcasted_iota(jnp.int32, (ROWS, NC), 1)
    t_lane = jnp.where(lane_id < H, T0, jnp.where(lane_id < 2 * H, T1, T2))
    valid = row_id < t_lane

    fmax = jnp.max(jnp.where(valid, c, -jnp.inf), axis=0, keepdims=True)
    lane1 = jax.lax.broadcasted_iota(jnp.int32, (1, NC), 1)
    inv_t = jnp.where(lane1 < H, 1.0 / T0,
                      jnp.where(lane1 < 2 * H, 1.0 / T1, 1.0 / T2))
    favg = jnp.sum(jnp.where(valid, c, 0.0), axis=0, keepdims=True) * inv_t

    # Kernel feature order [max0|max1|max2|avg0|avg1|avg2]; the FC weight rows
    # were permuted on the host to match torch's cat order, so no re-shuffle.
    feat = jnp.concatenate([fmax, favg], axis=1)             # (1, 6H)

    # TODO(synk): Dropout is identity at inference; training-mode RNG mask not implemented.
    o_ref[...] = (jnp.dot(feat, fc_ref[0:6 * H, :],
                          preferred_element_type=jnp.float32)
                  + fc_ref[6 * H:6 * H + 1, :])


# --------------------- one-time host-side param packing ---------------------
def pack_params(params, embed_dim, hidden_dim, out_dim):
    """Pack module params into two lane-aligned buffers (done once)."""
    (w0, b0), (w1, b1), (w2, b2), (fcw, fcb) = params
    E, H = embed_dim, hidden_dim
    KR, NC = 6 * E, 3 * H

    # Block-diagonal conv weight; row KR carries the three biases.
    conv_wb = jnp.zeros((KR + 8, NC), jnp.float32)
    row = col = 0
    for k, (w, b) in zip(FILTERS, ((w0, b0), (w1, b1), (w2, b2))):
        # (H, E, k) -> (k*E, H) with flat index j*E + e, matching cols layout.
        wf = jnp.transpose(w, (2, 1, 0)).reshape(k * E, H)
        conv_wb = conv_wb.at[row:row + k * E, col:col + H].set(wf)
        conv_wb = conv_wb.at[KR, col:col + H].set(b)
        row += k * E
        col += H

    # FC: permute rows so torch feature order [max0,avg0,max1,avg1,max2,avg2]
    # matches kernel order [max0,max1,max2,avg0,avg1,avg2]; pad lanes to 128;
    # row 6H carries the bias.
    idx = jnp.arange(H)
    perm = jnp.concatenate([idx, idx + 2 * H, idx + 4 * H,
                            idx + H, idx + 3 * H, idx + 5 * H])
    fc_wb = jnp.zeros((6 * H + 8, OUT_LANES), jnp.float32)
    fc_wb = fc_wb.at[0:6 * H, 0:out_dim].set(fcw[:, perm].T)
    fc_wb = fc_wb.at[6 * H, 0:out_dim].set(fcb)
    return conv_wb, fc_wb


# ------------------------------- glue (JAX) --------------------------------
def cnn_forward(x, packed, out_dim):
    """x: (1, L, E) float32 (batch must be 1, as implied by squeeze(0) in torch)."""
    conv_wb, fc_wb = packed
    B, L, E = x.shape
    assert B == 1, "module semantics (squeeze(0)) require batch == 1"
    H = conv_wb.shape[1] // 3
    rows = _round_up(L + 2, 8)       # sublane-aligned T_max (k=1 output length)

    vmem = pl.BlockSpec(memory_space=pltpu.MemorySpace.VMEM)
    out = pl.pallas_call(
        functools.partial(cnn_kernel, L=L, E=E, H=H),
        out_shape=jax.ShapeDtypeStruct((1, OUT_LANES), jnp.float32),
        in_specs=[vmem, vmem, vmem],
        out_specs=vmem,
        scratch_shapes=[pltpu.VMEM((rows, E), jnp.float32),        # padded x
                        pltpu.VMEM((rows, 6 * E), jnp.float32)],   # packed cols
    )(x, conv_wb, fc_wb)
    # Kernel writes a lane-dense (1, 128) row; slice back to the true out_dim.
    return out[:, :out_dim]


# --------------------------- pure-JAX reference -----------------------------
def reference_forward(x, params):
    (w0, b0), (w1, b1), (w2, b2), (fcw, fcb) = params
    xt = jnp.transpose(x, (0, 2, 1))  # (1, E, L)
    feats = []
    for k, w, b in ((1, w0, b0), (2, w1, b1), (3, w2, b2)):
        c = jax.lax.conv_general_dilated(
            xt, w, window_strides=(k,), padding=[(1, 1)],
            dimension_numbers=('NCH', 'OIH', 'NCH'))
        c = c + b[None, :, None]
        c = jnp.where(c > 0, c, NEG_SLOPE * c)
        feats.append(jnp.max(c, axis=2))
        feats.append(jnp.mean(c, axis=2))
    concat = jnp.concatenate(feats, axis=1)  # (1, 6H)
    return concat @ fcw.T + fcb[None, :]


# ------------------------------ param init ----------------------------------
def xavier_normal(key, shape, fan_in, fan_out):
    std = (2.0 / (fan_in + fan_out)) ** 0.5
    return std * jax.random.normal(key, shape, dtype=jnp.float32)


def init_params(key, embed_dim, hidden_dim, out_dim):
    ks = jax.random.split(key, 8)
    params = []
    for i, k in enumerate(FILTERS):
        w = xavier_normal(ks[2 * i], (hidden_dim, embed_dim, k),
                          embed_dim * k, hidden_dim * k)
        b = 0.01 * jax.random.normal(ks[2 * i + 1], (hidden_dim,), jnp.float32)
        params.append((w, b))
    fcw = xavier_normal(ks[6], (out_dim, 6 * hidden_dim), 6 * hidden_dim, out_dim)
    fcb = 0.01 * jax.random.normal(ks[7], (out_dim,), jnp.float32)
    params.append((fcw, fcb))
    return params


# ---------------------------------- main -------------------------------------
if __name__ == "__main__":
    B, L, E = 1, 16, 32          # batch must be 1 (squeeze(0) in the torch forward)
    H, OUT = 32, 10

    key = jax.random.PRNGKey(0)
    k_x, k_p = jax.random.split(key)
    x = jax.random.normal(k_x, (B, L, E), dtype=jnp.float32)
    params = init_params(k_p, E, H, OUT)
    packed = pack_params(params, E, H, OUT)      # one-time host packing

    out = jax.block_until_ready(cnn_forward(x, packed, OUT))
    ref = jax.block_until_ready(reference_forward(x, params))

    assert out.shape == (1, OUT), out.shape
    assert jnp.allclose(out, ref, atol=1e-4, rtol=1e-4), (out, ref)
    print("KERNEL_OK")
</pallas_src>

<mosaic_0001>
module attributes {stable_mosaic.version = 11 : i64} {
  func.func @cnn_kernel(%arg0: memref<1x16x32xf32, #tpu.memory_space<vmem>>, %arg1: memref<200x96xf32, #tpu.memory_space<vmem>>, %arg2: memref<200x128xf32, #tpu.memory_space<vmem>>, %arg3: memref<1x128xf32, #tpu.memory_space<vmem>>, %arg4: memref<24x32xf32, #tpu.memory_space<vmem>>, %arg5: memref<24x192xf32, #tpu.memory_space<vmem>>) attributes {dimension_semantics = [], scalar_prefetch = 0 : i64, scratch_operands = 2 : i64, tpu.core_type = #tpu.core_type<tc>} {
    %cst = arith.constant 0.000000e+00 : f32
    %0 = vector.broadcast %cst : f32 to vector<24x32xf32>
    %c0 = arith.constant 0 : index
    %c0_0 = arith.constant 0 : index
    %1 = vector.load %arg4[%c0, %c0_0] : memref<24x32xf32, #tpu.memory_space<vmem>>, vector<24x32xf32>
    tpu.vector_store %arg4[%c0, %c0_0], %0 {strides = array<i32>} : memref<24x32xf32, #tpu.memory_space<vmem>>, vector<24x32xf32>,
    %cst_1 = arith.constant 0.000000e+00 : f32
    %2 = vector.broadcast %cst_1 : f32 to vector<24x192xf32>
    %c0_2 = arith.constant 0 : index
    %c0_3 = arith.constant 0 : index
    %3 = vector.load %arg5[%c0_2, %c0_3] : memref<24x192xf32, #tpu.memory_space<vmem>>, vector<24x192xf32>
    tpu.vector_store %arg5[%c0_2, %c0_3], %2 {strides = array<i32>} : memref<24x192xf32, #tpu.memory_space<vmem>>, vector<24x192xf32>,
    %c0_4 = arith.constant 0 : index
    %c0_5 = arith.constant 0 : index
    %c0_6 = arith.constant 0 : index
    %4 = vector.load %arg0[%c0_4, %c0_5, %c0_6] : memref<1x16x32xf32, #tpu.memory_space<vmem>>, vector<1x16x32xf32>
    %5 = vector.shape_cast %4 : vector<1x16x32xf32> to vector<16x32xf32>
    %c1 = arith.constant 1 : index
    %c0_7 = arith.constant 0 : index
    %6 = vector.load %arg4[%c1, %c0_7] : memref<24x32xf32, #tpu.memory_space<vmem>>, vector<16x32xf32>
    tpu.vector_store %arg4[%c1, %c0_7], %5 {strides = array<i32>} : memref<24x32xf32, #tpu.memory_space<vmem>>, vector<16x32xf32>,
    %c0_8 = arith.constant 0 : index
    %c0_9 = arith.constant 0 : index
    %7 = vector.load %arg4[%c0_8, %c0_9] : memref<24x32xf32, #tpu.memory_space<vmem>>, vector<18x32xf32>
    %c0_10 = arith.constant 0 : index
    %c0_11 = arith.constant 0 : index
    %8 = vector.load %arg5[%c0_10, %c0_11] : memref<24x192xf32, #tpu.memory_space<vmem>>, vector<18x32xf32>
    tpu.vector_store %arg5[%c0_10, %c0_11], %7 {strides = array<i32>} : memref<24x192xf32, #tpu.memory_space<vmem>>, vector<18x32xf32>,
    %c0_12 = arith.constant 0 : index
    %c0_13 = arith.constant 0 : index
    %9 = vector.load %arg4[%c0_12, %c0_13] : memref<24x32xf32, #tpu.memory_space<vmem>>, vector<1x32xf32>
    %c0_14 = arith.constant 0 : index
    %c32 = arith.constant 32 : index
    %10 = vector.load %arg5[%c0_14, %c32] : memref<24x192xf32, #tpu.memory_space<vmem>>, vector<1x32xf32>
    tpu.vector_store %arg5[%c0_14, %c32], %9 {strides = array<i32>} : memref<24x192xf32, #tpu.memory_space<vmem>>, vector<1x32xf32>,
    %c2 = arith.constant 2 : index
    %c0_15 = arith.constant 0 : index
    %11 = vector.load %arg4[%c2, %c0_15] : memref<24x32xf32, #tpu.memory_space<vmem>>, vector<1x32xf32>
    %c1_16 = arith.constant 1 : index
    %c32_17 = arith.constant 32 : index
    %12 = vector.load %arg5[%c1_16, %c32_17] : memref<24x192xf32, #tpu.memory_space<vmem>>, vector<1x32xf32>
    tpu.vector_store %arg5[%c1_16, %c32_17], %11 {strides = array<i32>} : memref<24x192xf32, #tpu.memory_space<vmem>>, vector<1x32xf32>,
    %c4 = arith.constant 4 : index
    %c0_18 = arith.constant 0 : index
    %13 = vector.load %arg4[%c4, %c0_18] : memref<24x32xf32, #tpu.memory_space<vmem>>, vector<1x32xf32>
    %c2_19 = arith.constant 2 : index
    %c32_20 = arith.constant 32 : index
    %14 = vector.load %arg5[%c2_19, %c32_20] : memref<24x192xf32, #tpu.memory_space<vmem>>, vector<1x32xf32>
    tpu.vector_store %arg5[%c2_19, %c32_20], %13 {strides = array<i32>} : memref<24x192xf32, #tpu.memory_space<vmem>>, vector<1x32xf32>,
    %c6 = arith.constant 6 : index
    %c0_21 = arith.constant 0 : index
    %15 = vector.load %arg4[%c6, %c0_21] : memref<24x32xf32, #tpu.memory_space<vmem>>, vector<1x32xf32>
    %c3 = arith.constant 3 : index
    %c32_22 = arith.constant 32 : index
    %16 = vector.load %arg5[%c3, %c32_22] : memref<24x192xf32, #tpu.memory_space<vmem>>, vector<1x32xf32>
    tpu.vector_store %arg5[%c3, %c32_22], %15 {strides = array<i32>} : memref<24x192xf32, #tpu.memory_space<vmem>>, vector<1x32xf32>,
    %c8 = arith.constant 8 : index
    %c0_23 = arith.constant 0 : index
    %17 = vector.load %arg4[%c8, %c0_23] : memref<24x32xf32, #tpu.memory_space<vmem>>, vector<1x32xf32>
    %c4_24 = arith.constant 4 : index
    %c32_25 = arith.constant 32 : index
    %18 = vector.load %arg5[%c4_24, %c32_25] : memref<24x192xf32, #tpu.memory_space<vmem>>, vector<1x32xf32>
    tpu.vector_store %arg5[%c4_24, %c32_25], %17 {strides = array<i32>} : memref<24x192xf32, #tpu.memory_space<vmem>>, vector<1x32xf32>,
    %c10 = arith.constant 10 : index
    %c0_26 = arith.constant 0 : index
    %19 = vector.load %arg4[%c10, %c0_26] : memref<24x32xf32, #tpu.memory_space<vmem>>, vector<1x32xf32>
    %c5 = arith.constant 5 : index
    %c32_27 = arith.constant 32 : index
    %20 = vector.load %arg5[%c5, %c32_27] : memref<24x192xf32, #tpu.memory_space<vmem>>, vector<1x32xf32>
    tpu.vector_store %arg5[%c5, %c32_27], %19 {strides = array<i32>} : memref<24x192xf32, #tpu.memory_space<vmem>>, vector<1x32xf32>,
    %c12 = arith.constant 12 : index
    %c0_28 = arith.constant 0 : index
    %21 = vector.load %arg4[%c12, %c0_28] : memref<24x32xf32, #tpu.memory_space<vmem>>, vector<1x32xf32>
    %c6_29 = arith.constant 6 : index
    %c32_30 = arith.constant 32 : index
    %22 = vector.load %arg5[%c6_29, %c32_30] : memref<24x192xf32, #tpu.memory_space<vmem>>, vector<1x32xf32>
    tpu.vector_store %arg5[%c6_29, %c32_30], %21 {strides = array<i32>} : memref<24x192xf32, #tpu.memory_space<vmem>>, vector<1x32xf32>,
    %c14 = arith.constant 14 : index
    %c0_31 = arith.constant 0 : index
    %23 = vector.load %arg4[%c14, %c0_31] : memref<24x32xf32, #tpu.memory_space<vmem>>, vector<1x32xf32>
    %c7 = arith.constant 7 : index
    %c32_32 = arith.constant 32 : index
    %24 = vector.load %arg5[%c7, %c32_32] : memref<24x192xf32, #tpu.memory_space<vmem>>, vector<1x32xf32>
    tpu.vector_store %arg5[%c7, %c32_32], %23 {strides = array<i32>} : memref<24x192xf32, #tpu.memory_space<vmem>>, vector<1x32xf32>,
    %c16 = arith.constant 16 : index
    %c0_33 = arith.constant 0 : index
    %25 = vector.load %arg4[%c16, %c0_33] : memref<24x32xf32, #tpu.memory_space<vmem>>, vector<1x32xf32>
    %c8_34 = arith.constant 8 : index
    %c32_35 = arith.constant 32 : index
    %26 = vector.load %arg5[%c8_34, %c32_35] : memref<24x192xf32, #tpu.memory_space<vmem>>, vector<1x32xf32>
    tpu.vector_store %arg5[%c8_34, %c32_35], %25 {strides = array<i32>} : memref<24x192xf32, #tpu.memory_space<vmem>>, vector<1x32xf32>,
    %c1_36 = arith.constant 1 : index
    %c0_37 = arith.constant 0 : index
    %27 = vector.load %arg4[%c1_36, %c0_37] : memref<24x32xf32, #tpu.memory_space<vmem>>, vector<1x32xf32>
    %c0_38 = arith.constant 0 : index
    %c64 = arith.constant 64 : index
    %28 = vector.load %arg5[%c0_38, %c64] : memref<24x192xf32, #tpu.memory_space<vmem>>, vector<1x32xf32>
    tpu.vector_store %arg5[%c0_38, %c64], %27 {strides = array<i32>} : memref<24x192xf32, #tpu.memory_space<vmem>>, vector<1x32xf32>,
    %c3_39 = arith.constant 3 : index
    %c0_40 = arith.constant 0 : index
    %29 = vector.load %arg4[%c3_39, %c0_40] : memref<24x32xf32, #tpu.memory_space<vmem>>, vector<1x32xf32>
    %c1_41 = arith.constant 1 : index
    %c64_42 = arith.constant 64 : index
    %30 = vector.load %arg5[%c1_41, %c64_42] : memref<24x192xf32, #tpu.memory_space<vmem>>, vector<1x32xf32>
    tpu.vector_store %arg5[%c1_41, %c64_42], %29 {strides = array<i32>} : memref<24x192xf32, #tpu.memory_space<vmem>>, vector<1x32xf32>,
    %c5_43 = arith.constant 5 : index
    %c0_44 = arith.constant 0 : index
    %31 = vector.load %arg4[%c5_43, %c0_44] : memref<24x32xf32, #tpu.memory_space<vmem>>, vector<1x32xf32>
    %c2_45 = arith.constant 2 : index
    %c64_46 = arith.constant 64 : index
    %32 = vector.load %arg5[%c2_45, %c64_46] : memref<24x192xf32, #tpu.memory_space<vmem>>, vector<1x32xf32>
    tpu.vector_store %arg5[%c2_45, %c64_46], %31 {strides = array<i32>} : memref<24x192xf32, #tpu.memory_space<vmem>>, vector<1x32xf32>,
    %c7_47 = arith.constant 7 : index
    %c0_48 = arith.constant 0 : index
    %33 = vector.load %arg4[%c7_47, %c0_48] : memref<24x32xf32, #tpu.memory_space<vmem>>, vector<1x32xf32>
    %c3_49 = arith.constant 3 : index
    %c64_50 = arith.constant 64 : index
    %34 = vector.load %arg5[%c3_49, %c64_50] : memref<24x192xf32, #tpu.memory_space<vmem>>, vector<1x32xf32>
    tpu.vector_store %arg5[%c3_49, %c64_50], %33 {strides = array<i32>} : memref<24x192xf32, #tpu.memory_space<vmem>>, vector<1x32xf32>,
    %c9 = arith.constant 9 : index
    %c0_51 = arith.constant 0 : index
    %35 = vector.load %arg4[%c9, %c0_51] : memref<24x32xf32, #tpu.memory_space<vmem>>, vector<1x32xf32>
    %c4_52 = arith.constant 4 : index
    %c64_53 = arith.constant 64 : index
    %36 = vector.load %arg5[%c4_52, %c64_53] : memref<24x192xf32, #tpu.memory_space<vmem>>, vector<1x32xf32>
    tpu.vector_store %arg5[%c4_52, %c64_53], %35 {strides = array<i32>} : memref<24x192xf32, #tpu.memory_space<vmem>>, vector<1x32xf32>,
    %c11 = arith.constant 11 : index
    %c0_54 = arith.constant 0 : index
    %37 = vector.load %arg4[%c11, %c0_54] : memref<24x32xf32, #tpu.memory_space<vmem>>, vector<1x32xf32>
    %c5_55 = arith.constant 5 : index
    %c64_56 = arith.constant 64 : index
    %38 = vector.load %arg5[%c5_55, %c64_56] : memref<24x192xf32, #tpu.memory_space<vmem>>, vector<1x32xf32>
    tpu.vector_store %arg5[%c5_55, %c64_56], %37 {strides = array<i32>} : memref<24x192xf32, #tpu.memory_space<vmem>>, vector<1x32xf32>,
    %c13 = arith.constant 13 : index
    %c0_57 = arith.constant 0 : index
    %39 = vector.load %arg4[%c13, %c0_57] : memref<24x32xf32, #tpu.memory_space<vmem>>, vector<1x32xf32>
    %c6_58 = arith.constant 6 : index
    %c64_59 = arith.constant 64 : index
    %40 = vector.load %arg5[%c6_58, %c64_59] : memref<24x192xf32, #tpu.memory_space<vmem>>, vector<1x32xf32>
    tpu.vector_store %arg5[%c6_58, %c64_59], %39 {strides = array<i32>} : memref<24x192xf32, #tpu.memory_space<vmem>>, vector<1x32xf32>,
    %c15 = arith.constant 15 : index
    %c0_60 = arith.constant 0 : index
    %41 = vector.load %arg4[%c15, %c0_60] : memref<24x32xf32, #tpu.memory_space<vmem>>, vector<1x32xf32>
    %c7_61 = arith.constant 7 : index
    %c64_62 = arith.constant 64 : index
    %42 = vector.load %arg5[%c7_61, %c64_62] : memref<24x192xf32, #tpu.memory_space<vmem>>, vector<1x32xf32>
    tpu.vector_store %arg5[%c7_61, %c64_62], %41 {strides = array<i32>} : memref<24x192xf32, #tpu.memory_space<vmem>>, vector<1x32xf32>,
    %c17 = arith.constant 17 : index
    %c0_63 = arith.constant 0 : index
    %43 = vector.load %arg4[%c17, %c0_63] : memref<24x32xf32, #tpu.memory_space<vmem>>, vector<1x32xf32>
    %c8_64 = arith.constant 8 : index
    %c64_65 = arith.constant 64 : index
    %44 = vector.load %arg5[%c8_64, %c64_65] : memref<24x192xf32, #tpu.memory_space<vmem>>, vector<1x32xf32>
    tpu.vector_store %arg5[%c8_64, %c64_65], %43 {strides = array<i32>} : memref<24x192xf32, #tpu.memory_space<vmem>>, vector<1x32xf32>,
    %c0_66 = arith.constant 0 : index
    %c0_67 = arith.constant 0 : index
    %45 = vector.load %arg4[%c0_66, %c0_67] : memref<24x32xf32, #tpu.memory_space<vmem>>, vector<1x32xf32>
    %c0_68 = arith.constant 0 : index
    %c96 = arith.constant 96 : index
    %46 = vector.load %arg5[%c0_68, %c96] : memref<24x192xf32, #tpu.memory_space<vmem>>, vector<1x32xf32>
    tpu.vector_store %arg5[%c0_68, %c96], %45 {strides = array<i32>} : memref<24x192xf32, #tpu.memory_space<vmem>>, vector<1x32xf32>,
    %c3_69 = arith.constant 3 : index
    %c0_70 = arith.constant 0 : index
    %47 = vector.load %arg4[%c3_69, %c0_70] : memref<24x32xf32, #tpu.memory_space<vmem>>, vector<1x32xf32>
    %c1_71 = arith.constant 1 : index
    %c96_72 = arith.constant 96 : index
    %48 = vector.load %arg5[%c1_71, %c96_72] : memref<24x192xf32, #tpu.memory_space<vmem>>, vector<1x32xf32>
    tpu.vector_store %arg5[%c1_71, %c96_72], %47 {strides = array<i32>} : memref<24x192xf32, #tpu.memory_space<vmem>>, vector<1x32xf32>,
    %c6_73 = arith.constant 6 : index
    %c0_74 = arith.constant 0 : index
    %49 = vector.load %arg4[%c6_73, %c0_74] : memref<24x32xf32, #tpu.memory_space<vmem>>, vector<1x32xf32>
    %c2_75 = arith.constant 2 : index
    %c96_76 = arith.constant 96 : index
    %50 = vector.load %arg5[%c2_75, %c96_76] : memref<24x192xf32, #tpu.memory_space<vmem>>, vector<1x32xf32>
    tpu.vector_store %arg5[%c2_75, %c96_76], %49 {strides = array<i32>} : memref<24x192xf32, #tpu.memory_space<vmem>>, vector<1x32xf32>,
    %c9_77 = arith.constant 9 : index
    %c0_78 = arith.constant 0 : index
    %51 = vector.load %arg4[%c9_77, %c0_78] : memref<24x32xf32, #tpu.memory_space<vmem>>, vector<1x32xf32>
    %c3_79 = arith.constant 3 : index
    %c96_80 = arith.constant 96 : index
    %52 = vector.load %arg5[%c3_79, %c96_80] : memref<24x192xf32, #tpu.memory_space<vmem>>, vector<1x32xf32>
    tpu.vector_store %arg5[%c3_79, %c96_80], %51 {strides = array<i32>} : memref<24x192xf32, #tpu.memory_space<vmem>>, vector<1x32xf32>,
    %c12_81 = arith.constant 12 : index
    %c0_82 = arith.constant 0 : index
    %53 = vector.load %arg4[%c12_81, %c0_82] : memref<24x32xf32, #tpu.memory_space<vmem>>, vector<1x32xf32>
    %c4_83 = arith.constant 4 : index
    %c96_84 = arith.constant 96 : index
    %54 = vector.load %arg5[%c4_83, %c96_84] : memref<24x192xf32, #tpu.memory_space<vmem>>, vector<1x32xf32>
    tpu.vector_store %arg5[%c4_83, %c96_84], %53 {strides = array<i32>} : memref<24x192xf32, #tpu.memory_space<vmem>>, vector<1x32xf32>,
    %c15_85 = arith.constant 15 : index
    %c0_86 = arith.constant 0 : index
    %55 = vector.load %arg4[%c15_85, %c0_86] : memref<24x32xf32, #tpu.memory_space<vmem>>, vector<1x32xf32>
    %c5_87 = arith.constant 5 : index
    %c96_88 = arith.constant 96 : index
    %56 = vector.load %arg5[%c5_87, %c96_88] : memref<24x192xf32, #tpu.memory_space<vmem>>, vector<1x32xf32>
    tpu.vector_store %arg5[%c5_87, %c96_88], %55 {strides = array<i32>} : memref<24x192xf32, #tpu.memory_space<vmem>>, vector<1x32xf32>,
    %c1_89 = arith.constant 1 : index
    %c0_90 = arith.constant 0 : index
    %57 = vector.load %arg4[%c1_89, %c0_90] : memref<24x32xf32, #tpu.memory_space<vmem>>, vector<1x32xf32>
    %c0_91 = arith.constant 0 : index
    %c128 = arith.constant 128 : index
    %58 = vector.load %arg5[%c0_91, %c128] : memref<24x192xf32, #tpu.memory_space<vmem>>, vector<1x32xf32>
    tpu.vector_store %arg5[%c0_91, %c128], %57 {strides = array<i32>} : memref<24x192xf32, #tpu.memory_space<vmem>>, vector<1x32xf32>,
    %c4_92 = arith.constant 4 : index
    %c0_93 = arith.constant 0 : index
    %59 = vector.load %arg4[%c4_92, %c0_93] : memref<24x32xf32, #tpu.memory_space<vmem>>, vector<1x32xf32>
    %c1_94 = arith.constant 1 : index
    %c128_95 = arith.constant 128 : index
    %60 = vector.load %arg5[%c1_94, %c128_95] : memref<24x192xf32, #tpu.memory_space<vmem>>, vector<1x32xf32>
    tpu.vector_store %arg5[%c1_94, %c128_95], %59 {strides = array<i32>} : memref<24x192xf32, #tpu.memory_space<vmem>>, vector<1x32xf32>,
    %c7_96 = arith.constant 7 : index
    %c0_97 = arith.constant 0 : index
    %61 = vector.load %arg4[%c7_96, %c0_97] : memref<24x32xf32, #tpu.memory_space<vmem>>, vector<1x32xf32>
    %c2_98 = arith.constant 2 : index
    %c128_99 = arith.constant 128 : index
    %62 = vector.load %arg5[%c2_98, %c128_99] : memref<24x192xf32, #tpu.memory_space<vmem>>, vector<1x32xf32>
    tpu.vector_store %arg5[%c2_98, %c128_99], %61 {strides = array<i32>} : memref<24x192xf32, #tpu.memory_space<vmem>>, vector<1x32xf32>,
    %c10_100 = arith.constant 10 : index
    %c0_101 = arith.constant 0 : index
    %63 = vector.load %arg4[%c10_100, %c0_101] : memref<24x32xf32, #tpu.memory_space<vmem>>, vector<1x32xf32>
    %c3_102 = arith.constant 3 : index
    %c128_103 = arith.constant 128 : index
    %64 = vector.load %arg5[%c3_102, %c128_103] : memref<24x192xf32, #tpu.memory_space<vmem>>, vector<1x32xf32>
    tpu.vector_store %arg5[%c3_102, %c128_103], %63 {strides = array<i32>} : memref<24x192xf32, #tpu.memory_space<vmem>>, vector<1x32xf32>,
    %c13_104 = arith.constant 13 : index
    %c0_105 = arith.constant 0 : index
    %65 = vector.load %arg4[%c13_104, %c0_105] : memref<24x32xf32, #tpu.memory_space<vmem>>, vector<1x32xf32>
    %c4_106 = arith.constant 4 : index
    %c128_107 = arith.constant 128 : index
    %66 = vector.load %arg5[%c4_106, %c128_107] : memref<24x192xf32, #tpu.memory_space<vmem>>, vector<1x32xf32>
    tpu.vector_store %arg5[%c4_106, %c128_107], %65 {strides = array<i32>} : memref<24x192xf32, #tpu.memory_space<vmem>>, vector<1x32xf32>,
    %c16_108 = arith.constant 16 : index
    %c0_109 = arith.constant 0 : index
    %67 = vector.load %arg4[%c16_108, %c0_109] : memref<24x32xf32, #tpu.memory_space<vmem>>, vector<1x32xf32>
    %c5_110 = arith.constant 5 : index
    %c128_111 = arith.constant 128 : index
    %68 = vector.load %arg5[%c5_110, %c128_111] : memref<24x192xf32, #tpu.memory_space<vmem>>, vector<1x32xf32>
    tpu.vector_store %arg5[%c5_110, %c128_111], %67 {strides = array<i32>} : memref<24x192xf32, #tpu.memory_space<vmem>>, vector<1x32xf32>,
    %c2_112 = arith.constant 2 : index
    %c0_113 = arith.constant 0 : index
    %69 = vector.load %arg4[%c2_112, %c0_113] : memref<24x32xf32, #tpu.memory_space<vmem>>, vector<1x32xf32>
    %c0_114 = arith.constant 0 : index
    %c160 = arith.constant 160 : index
    %70 = vector.load %arg5[%c0_114, %c160] : memref<24x192xf32, #tpu.memory_space<vmem>>, vector<1x32xf32>
    tpu.vector_store %arg5[%c0_114, %c160], %69 {strides = array<i32>} : memref<24x192xf32, #tpu.memory_space<vmem>>, vector<1x32xf32>,
    %c5_115 = arith.constant 5 : index
    %c0_116 = arith.constant 0 : index
    %71 = vector.load %arg4[%c5_115, %c0_116] : memref<24x32xf32, #tpu.memory_space<vmem>>, vector<1x32xf32>
    %c1_117 = arith.constant 1 : index
    %c160_118 = arith.constant 160 : index
    %72 = vector.load %arg5[%c1_117, %c160_118] : memref<24x192xf32, #tpu.memory_space<vmem>>, vector<1x32xf32>
    tpu.vector_store %arg5[%c1_117, %c160_118], %71 {strides = array<i32>} : memref<24x192xf32, #tpu.memory_space<vmem>>, vector<1x32xf32>,
    %c8_119 = arith.constant 8 : index
    %c0_120 = arith.constant 0 : index
    %73 = vector.load %arg4[%c8_119, %c0_120] : memref<24x32xf32, #tpu.memory_space<vmem>>, vector<1x32xf32>
    %c2_121 = arith.constant 2 : index
    %c160_122 = arith.constant 160 : index
    %74 = vector.load %arg5[%c2_121, %c160_122] : memref<24x192xf32, #tpu.memory_space<vmem>>, vector<1x32xf32>
    tpu.vector_store %arg5[%c2_121, %c160_122], %73 {strides = array<i32>} : memref<24x192xf32, #tpu.memory_space<vmem>>, vector<1x32xf32>,
    %c11_123 = arith.constant 11 : index
    %c0_124 = arith.constant 0 : index
    %75 = vector.load %arg4[%c11_123, %c0_124] : memref<24x32xf32, #tpu.memory_space<vmem>>, vector<1x32xf32>
    %c3_125 = arith.constant 3 : index
    %c160_126 = arith.constant 160 : index
    %76 = vector.load %arg5[%c3_125, %c160_126] : memref<24x192xf32, #tpu.memory_space<vmem>>, vector<1x32xf32>
    tpu.vector_store %arg5[%c3_125, %c160_126], %75 {strides = array<i32>} : memref<24x192xf32, #tpu.memory_space<vmem>>, vector<1x32xf32>,
    %c14_127 = arith.constant 14 : index
    %c0_128 = arith.constant 0 : index
    %77 = vector.load %arg4[%c14_127, %c0_128] : memref<24x32xf32, #tpu.memory_space<vmem>>, vector<1x32xf32>
    %c4_129 = arith.constant 4 : index
    %c160_130 = arith.constant 160 : index
    %78 = vector.load %arg5[%c4_129, %c160_130] : memref<24x192xf32, #tpu.memory_space<vmem>>, vector<1x32xf32>
    tpu.vector_store %arg5[%c4_129, %c160_130], %77 {strides = array<i32>} : memref<24x192xf32, #tpu.memory_space<vmem>>, vector<1x32xf32>,
    %c17_131 = arith.constant 17 : index
    %c0_132 = arith.constant 0 : index
    %79 = vector.load %arg4[%c17_131, %c0_132] : memref<24x32xf32, #tpu.memory_space<vmem>>, vector<1x32xf32>
    %c5_133 = arith.constant 5 : index
    %c160_134 = arith.constant 160 : index
    %80 = vector.load %arg5[%c5_133, %c160_134] : memref<24x192xf32, #tpu.memory_space<vmem>>, vector<1x32xf32>
    tpu.vector_store %arg5[%c5_133, %c160_134], %79 {strides = array<i32>} : memref<24x192xf32, #tpu.memory_space<vmem>>, vector<1x32xf32>,
    %c0_135 = arith.constant 0 : index
    %c0_136 = arith.constant 0 : index
    %81 = vector.load %arg5[%c0_135, %c0_136] : memref<24x192xf32, #tpu.memory_space<vmem>>, vector<24x192xf32>
    %c0_137 = arith.constant 0 : index
    %c0_138 = arith.constant 0 : index
    %82 = vector.load %arg1[%c0_137, %c0_138] : memref<200x96xf32, #tpu.memory_space<vmem>>, vector<192x96xf32>
    %cst_139 = arith.constant dense<0.000000e+00> : vector<24x96xf32>
    %83 = tpu.matmul %81, %82, %cst_139 {dimension_numbers = #tpu.dot_dimension_numbers<[1], [0], [0], [1], [0, 0, 1, 1], [], []>} : vector<24x192xf32>, vector<192x96xf32>, vector<24x96xf32> -> vector<24x96xf32>
    %c192 = arith.constant 192 : index
    %c0_140 = arith.constant 0 : index
    %84 = vector.load %arg1[%c192, %c0_140] : memref<200x96xf32, #tpu.memory_space<vmem>>, vector<1x96xf32>
    %85 = vector.broadcast %84 : vector<1x96xf32> to vector<24x96xf32>
    %86 = arith.addf %83, %85 : vector<24x96xf32>
    %cst_141 = arith.constant 0.00999999977 : f32
    %87 = vector.broadcast %cst_141 : f32 to vector<24x96xf32>
    %88 = arith.mulf %87, %86 : vector<24x96xf32>
    %89 = arith.maximumf %86, %88 : vector<24x96xf32>
    %90 = tpu.iota {dimensions = array<i32: 0>} : vector<24x96xi32>
    %91 = tpu.iota {dimensions = array<i32: 1>} : vector<24x96xi32>
    %c32_i32 = arith.constant 32 : i32
    %92 = vector.broadcast %c32_i32 : i32 to vector<24x96xi32>
    %93 = arith.cmpi slt, %91, %92 : vector<24x96xi32>
    %c64_i32 = arith.constant 64 : i32
    %94 = vector.broadcast %c64_i32 : i32 to vector<24x96xi32>
    %95 = arith.cmpi slt, %91, %94 : vector<24x96xi32>
    %c9_i32 = arith.constant 9 : i32
    %c6_i32 = arith.constant 6 : i32
    %96 = vector.broadcast %c9_i32 : i32 to vector<24x96xi32>
    %97 = vector.broadcast %c6_i32 : i32 to vector<24x96xi32>
    %98 = arith.select %95, %96, %97 : vector<24x96xi1>, vector<24x96xi32>
    %c18_i32 = arith.constant 18 : i32
    %99 = vector.broadcast %c18_i32 : i32 to vector<24x96xi32>
    %100 = arith.select %93, %99, %98 : vector<24x96xi1>, vector<24x96xi32>
    %101 = arith.cmpi slt, %90, %100 : vector<24x96xi32>
    %cst_142 = arith.constant 0xFF800000 : f32
    %102 = vector.broadcast %cst_142 : f32 to vector<24x96xf32>
    %103 = arith.select %101, %89, %102 : vector<24x96xi1>, vector<24x96xf32>
    %cst_143 = arith.constant dense<0xFF800000> : vector<96xf32>
    %104 = vector.multi_reduction <maximumf>, %103, %cst_143 [0] : vector<24x96xf32> to vector<96xf32>
    %105 = vector.shape_cast %104 : vector<96xf32> to vector<1x96xf32>
    %106 = tpu.iota {dimensions = array<i32: 1>} : vector<1x96xi32>
    %c32_i32_144 = arith.constant 32 : i32
    %107 = vector.broadcast %c32_i32_144 : i32 to vector<1x96xi32>
    %108 = arith.cmpi slt, %106, %107 : vector<1x96xi32>
    %c64_i32_145 = arith.constant 64 : i32
    %109 = vector.broadcast %c64_i32_145 : i32 to vector<1x96xi32>
    %110 = arith.cmpi slt, %106, %109 : vector<1x96xi32>
    %cst_146 = arith.constant 0.111111112 : f32
    %cst_147 = arith.constant 0.166666672 : f32
    %111 = vector.broadcast %cst_146 : f32 to vector<1x96xf32>
    %112 = vector.broadcast %cst_147 : f32 to vector<1x96xf32>
    %113 = arith.select %110, %111, %112 : vector<1x96xi1>, vector<1x96xf32>
    %cst_148 = arith.constant 0.055555556 : f32
    %114 = vector.broadcast %cst_148 : f32 to vector<1x96xf32>
    %115 = arith.select %108, %114, %113 : vector<1x96xi1>, vector<1x96xf32>
    %cst_149 = arith.constant 0.000000e+00 : f32
    %116 = vector.broadcast %cst_149 : f32 to vector<24x96xf32>
    %117 = arith.select %101, %89, %116 : vector<24x96xi1>, vector<24x96xf32>
    %cst_150 = arith.constant dense<0.000000e+00> : vector<96xf32>
    %118 = vector.multi_reduction <add>, %117, %cst_150 [0] : vector<24x96xf32> to vector<96xf32>
    %119 = vector.shape_cast %118 : vector<96xf32> to vector<1x96xf32>
    %120 = arith.mulf %119, %115 : vector<1x96xf32>
    %121 = tpu.concatenate %105, %120 in 1 : vector<1x96xf32>, vector<1x96xf32> -> vector<1x192xf32>
    %c0_151 = arith.constant 0 : index
    %c0_152 = arith.constant 0 : index
    %122 = vector.load %arg2[%c0_151, %c0_152] : memref<200x128xf32, #tpu.memory_space<vmem>>, vector<192x128xf32>
    %cst_153 = arith.constant dense<0.000000e+00> : vector<1x128xf32>
    %123 = tpu.matmul %121, %122, %cst_153 {dimension_numbers = #tpu.dot_dimension_numbers<[1], [0], [0], [1], [0, 0, 1, 1], [], []>} : vector<1x192xf32>, vector<192x128xf32>, vector<1x128xf32> -> vector<1x128xf32>
    %c192_154 = arith.constant 192 : index
    %c0_155 = arith.constant 0 : index
    %124 = vector.load %arg2[%c192_154, %c0_155] : memref<200x128xf32, #tpu.memory_space<vmem>>, vector<1x128xf32>
    %125 = arith.addf %123, %124 : vector<1x128xf32>
    %c0_156 = arith.constant 0 : index
    %c0_157 = arith.constant 0 : index
    %126 = vector.load %arg3[%c0_156, %c0_157] : memref<1x128xf32, #tpu.memory_space<vmem>>, vector<1x128xf32>
    tpu.vector_store %arg3[%c0_156, %c0_157], %125 {strides = array<i32>} : memref<1x128xf32, #tpu.memory_space<vmem>>, vector<1x128xf32>,
    return
  }
}

</mosaic_0001>

<llo_original>
// kernel: tpu_custom_call.1
$region0: #{tpu_custom_call.1}
  #allocation0 [shape = 'u32[]', space=smem, size = 0x4, offset = 0x4, fixed_abs, tag = 'smem constant byte address 0x4 - core index']
  #allocation1 [shape = 'u32[144,128]{1,0:T(1,128)}', space=vmem, size = 0x12000, scoped, tag = 'internal scratch']
  #allocation2 [shape = 'f32[24,32]{1,0:T(8,128)}', space=vmem, size = 0x3000, scoped, tag = 'scratch operand']
  #allocation3 [shape = 'f32[24,192]{1,0:T(8,128)}', space=vmem, size = 0x6000, scoped, tag = 'scratch operand']
  %s0 = inlined_call_operand.vmem [shape: f32[1,16,32], index: 0, kind: input, shape index: {}]
  %s1 = inlined_call_operand.vmem [shape: f32[200,96], index: 1, kind: input, shape index: {}]
  %s2 = inlined_call_operand.vmem [shape: f32[200,128], index: 2, kind: input, shape index: {}]
  %s3 = inlined_call_operand.hbm [shape: f32[1,128], index: 3, kind: output, shape index: {}]
  %s4 = sld [smem:[#allocation0]]
  $region22: #{tpu_custom_call.1} parent=0
    _
  %s6 = ssub.s32 1, %s4
  %s7 = scalar_select 0, %s6, %s4
  $region1: #{tpu_custom_call.1} parent=0
    #allocation4 [shape = 'u8[512]{0}', space=vmem, size = 0x400, scoped, tag = 'output window, operand 0, single buffered']
    #allocation5 [shape = 's32[1]{0}', space=sflag, size = 0x4, scoped, tag = 'scoped memory for tpu_custom_call.1']
    %8 = vsyncpa [#allocation5], 0
    // Predicated region
    $region2: #{tpu_custom_call.1} parent=1 // pred_check
      _
    $region3: #{tpu_custom_call.1} parent=1 // pred_check_branch
      %10 = sbr.rel (0) target = $region5
    $region4: #{tpu_custom_call.1} parent=1 // pred_region
      _
    $region5: #{tpu_custom_call.1} parent=1 // pred_fallthru
      _
    // Predicated region
    $region6: #{tpu_custom_call.1} parent=1 // pred_check
      _
    $region7: #{tpu_custom_call.1} parent=1 // pred_check_branch
      %12 = sbr.rel (0) target = $region9
    $region8: #{tpu_custom_call.1} parent=1 // pred_region
      _
    $region9: #{tpu_custom_call.1} parent=1 // pred_fallthru
      _
    // Predicated region
    $region10: #{tpu_custom_call.1} parent=1 // pred_check
      _
    $region11: #{tpu_custom_call.1} parent=1 // pred_check_branch
      %14 = sbr.rel (0) target = $region13
    $region12: #{tpu_custom_call.1} parent=1 // pred_region
      _
    $region13: #{tpu_custom_call.1} parent=1 // pred_fallthru
      _
    %vm15 = vcmask 261120
    %16 = vst.msk [vmem:[#allocation2] sm:$0xff] %vm15, 0.0
    %17 = vst.msk [vmem:[#allocation2 + $0x8] sm:$0xff] %vm15, 0.0
    %18 = vst.msk [vmem:[#allocation2 + $0x10] sm:$0xff] %vm15, 0.0
    %19 = vst [vmem:[#allocation3] sm:$0xff] 0.0
    %vm20 = vcmask 523264
    %21 = vst.msk [vmem:[#allocation3 + $0x8] sm:$0xff] %vm20, 0.0
    %22 = vst [vmem:[#allocation3 + $0x10] sm:$0xff] 0.0
    %23 = vst.msk [vmem:[#allocation3 + $0x18] sm:$0xff] %vm20, 0.0
    %24 = vst [vmem:[#allocation3 + $0x20] sm:$0xff] 0.0
    %25 = vst.msk [vmem:[#allocation3 + $0x28] sm:$0xff] %vm20, 0.0
    %v26 = vld [vmem:[%s0] sm:$0xff]
    %v27 = vld [vmem:[%s0 + $0x8] sm:$0xff]
    %28 = vst.msk [vmem:[#allocation2 + $0x1] sm:$0xff] %vm15, %v26
    %29 = vst.msk [vmem:[#allocation2 + $0x9] sm:$0xff] %vm15, %v27
    %v30 = vld [vmem:[#allocation2] sm:$0xff]
    %v31 = vld [vmem:[#allocation2 + $0x8] sm:$0xff]
    %v32 = vld [vmem:[#allocation2 + $0x10] sm:$0x3]
    %33 = vst.msk [vmem:[#allocation3] sm:$0xff] %vm15, %v30
    %34 = vst.msk [vmem:[#allocation3 + $0x10] sm:$0xff] %vm15, %v31
    %vm35 = vcmask 254976
    %36 = vst.msk [vmem:[#allocation3 + $0x20] sm:$0x3] %vm35, %v32
    %v37 = vld [vmem:[#allocation2] sm:$0x1]
    %39 = vrot.lane.b32.xlu0 %v37, 32
    %v40 = vpop.permute.xlu0 %39
    %vm42 = vcmask 516352
    %43 = vst.msk [vmem:[#allocation3] sm:$0x1] %vm42, %v40
    %v44 = vld [vmem:[#allocation2 + $0x2] sm:$0x1]
    %46 = vrot.lane.b32.xlu0 %v44, 32
    %v47 = vpop.permute.xlu0 %46
    %49 = vst.msk [vmem:[#allocation3 + $0x1] sm:$0x1] %vm42, %v47
    %v50 = vld [vmem:[#allocation2 + $0x4] sm:$0x1]
    %52 = vrot.lane.b32.xlu0 %v50, 32
    %v53 = vpop.permute.xlu0 %52
    %55 = vst.msk [vmem:[#allocation3 + $0x2] sm:$0x1] %vm42, %v53
    %v56 = vld [vmem:[#allocation2 + $0x6] sm:$0x1]
    %58 = vrot.lane.b32.xlu0 %v56, 32
    %v59 = vpop.permute.xlu0 %58
    %61 = vst.msk [vmem:[#allocation3 + $0x3] sm:$0x1] %vm42, %v59
    %v62 = vld [vmem:[#allocation2 + $0x8] sm:$0x1]
    %64 = vrot.lane.b32.xlu0 %v62, 32
    %v65 = vpop.permute.xlu0 %64
    %67 = vst.msk [vmem:[#allocation3 + $0x4] sm:$0x1] %vm42, %v65
    %v68 = vld [vmem:[#allocation2 + $0xa] sm:$0x1]
    %70 = vrot.lane.b32.xlu0 %v68, 32
    %v71 = vpop.permute.xlu0 %70
    %73 = vst.msk [vmem:[#allocation3 + $0x5] sm:$0x1] %vm42, %v71
    %v74 = vld [vmem:[#allocation2 + $0xc] sm:$0x1]
    %76 = vrot.lane.b32.xlu0 %v74, 32
    %v77 = vpop.permute.xlu0 %76
    %79 = vst.msk [vmem:[#allocation3 + $0x6] sm:$0x1] %vm42, %v77
    %v80 = vld [vmem:[#allocation2 + $0xe] sm:$0x1]
    %82 = vrot.lane.b32.xlu0 %v80, 32
    %v83 = vpop.permute.xlu0 %82
    %85 = vst.msk [vmem:[#allocation3 + $0x7] sm:$0x1] %vm42, %v83
    %v86 = vld [vmem:[#allocation2 + $0x10] sm:$0x1]
    %88 = vrot.lane.b32.xlu0 %v86, 32
    %v89 = vpop.permute.xlu0 %88
    %91 = vst.msk [vmem:[#allocation3 + $0x10] sm:$0x1] %vm42, %v89
    %v92 = vld [vmem:[#allocation2 + $0x1] sm:$0x1]
    %94 = vrot.lane.b32.xlu0 %v92, 64
    %v95 = vpop.permute.xlu0 %94
    %vm97 = vcmask 778752
    %98 = vst.msk [vmem:[#allocation3] sm:$0x1] %vm97, %v95
    %v99 = vld [vmem:[#allocation2 + $0x3] sm:$0x1]
    %101 = vrot.lane.b32.xlu0 %v99, 64
    %v102 = vpop.permute.xlu0 %101
    %104 = vst.msk [vmem:[#allocation3 + $0x1] sm:$0x1] %vm97, %v102
    %v105 = vld [vmem:[#allocation2 + $0x5] sm:$0x1]
    %107 = vrot.lane.b32.xlu0 %v105, 64
    %v108 = vpop.permute.xlu0 %107
    %110 = vst.msk [vmem:[#allocation3 + $0x2] sm:$0x1] %vm97, %v108
    %v111 = vld [vmem:[#allocation2 + $0x7] sm:$0x1]
    %113 = vrot.lane.b32.xlu0 %v111, 64
    %v114 = vpop.permute.xlu0 %113
    %116 = vst.msk [vmem:[#allocation3 + $0x3] sm:$0x1] %vm97, %v114
    %v117 = vld [vmem:[#allocation2 + $0x9] sm:$0x1]
    %119 = vrot.lane.b32.xlu0 %v117, 64
    %v120 = vpop.permute.xlu0 %119
    %122 = vst.msk [vmem:[#allocation3 + $0x4] sm:$0x1] %vm97, %v120
    %v123 = vld [vmem:[#allocation2 + $0xb] sm:$0x1]
    %125 = vrot.lane.b32.xlu0 %v123, 64
    %v126 = vpop.permute.xlu0 %125
    %128 = vst.msk [vmem:[#allocation3 + $0x5] sm:$0x1] %vm97, %v126
    %v129 = vld [vmem:[#allocation2 + $0xd] sm:$0x1]
    %131 = vrot.lane.b32.xlu0 %v129, 64
    %v132 = vpop.permute.xlu0 %131
    %134 = vst.msk [vmem:[#allocation3 + $0x6] sm:$0x1] %vm97, %v132
    %v135 = vld [vmem:[#allocation2 + $0xf] sm:$0x1]
    %137 = vrot.lane.b32.xlu0 %v135, 64
    %v138 = vpop.permute.xlu0 %137
    %140 = vst.msk [vmem:[#allocation3 + $0x7] sm:$0x1] %vm97, %v138
    %v141 = vld [vmem:[#allocation2 + $0x11] sm:$0x1]
    %143 = vrot.lane.b32.xlu0 %v141, 64
    %v144 = vpop.permute.xlu0 %143
    %146 = vst.msk [vmem:[#allocation3 + $0x10] sm:$0x1] %vm97, %v144
    %v147 = vld [vmem:[#allocation2] sm:$0x1]
    %149 = vrot.lane.b32.xlu0 %v147, 96
    %v150 = vpop.permute.xlu0 %149
    %vm152 = vcmask 1041152
    %153 = vst.msk [vmem:[#allocation3] sm:$0x1] %vm152, %v150
    %v154 = vld [vmem:[#allocation2 + $0x3] sm:$0x1]
    %156 = vrot.lane.b32.xlu0 %v154, 96
    %v157 = vpop.permute.xlu0 %156
    %159 = vst.msk [vmem:[#allocation3 + $0x1] sm:$0x1] %vm152, %v157
    %v160 = vld [vmem:[#allocation2 + $0x6] sm:$0x1]
    %162 = vrot.lane.b32.xlu0 %v160, 96
    %v163 = vpop.permute.xlu0 %162
    %165 = vst.msk [vmem:[#allocation3 + $0x2] sm:$0x1] %vm152, %v163
    %v166 = vld [vmem:[#allocation2 + $0x9] sm:$0x1]
    %168 = vrot.lane.b32.xlu0 %v166, 96
    %v169 = vpop.permute.xlu0 %168
    %171 = vst.msk [vmem:[#allocation3 + $0x3] sm:$0x1] %vm152, %v169
    %v172 = vld [vmem:[#allocation2 + $0xc] sm:$0x1]
    %174 = vrot.lane.b32.xlu0 %v172, 96
    %v175 = vpop.permute.xlu0 %174
    %177 = vst.msk [vmem:[#allocation3 + $0x4] sm:$0x1] %vm152, %v175
    %v178 = vld [vmem:[#allocation2 + $0xf] sm:$0x1]
    %180 = vrot.lane.b32.xlu0 %v178, 96
    %v181 = vpop.permute.xlu0 %180
    %183 = vst.msk [vmem:[#allocation3 + $0x5] sm:$0x1] %vm152, %v181
    %v184 = vld [vmem:[#allocation2 + $0x1] sm:$0x1]
    %vm185 = vcmask 253952
    %186 = vst.msk [vmem:[#allocation3 + $0x8] sm:$0x1] %vm185, %v184
    %v187 = vld [vmem:[#allocation2 + $0x4] sm:$0x1]
    %188 = vst.msk [vmem:[#allocation3 + $0x9] sm:$0x1] %vm185, %v187
    %v189 = vld [vmem:[#allocation2 + $0x7] sm:$0x1]
    %190 = vst.msk [vmem:[#allocation3 + $0xa] sm:$0x1] %vm185, %v189
    %v191 = vld [vmem:[#allocation2 + $0xa] sm:$0x1]
    %192 = vst.msk [vmem:[#allocation3 + $0xb] sm:$0x1] %vm185, %v191
    %v193 = vld [vmem:[#allocation2 + $0xd] sm:$0x1]
    %194 = vst.msk [vmem:[#allocation3 + $0xc] sm:$0x1] %vm185, %v193
    %v195 = vld [vmem:[#allocation2 + $0x10] sm:$0x1]
    %196 = vst.msk [vmem:[#allocation3 + $0xd] sm:$0x1] %vm185, %v195
    %v197 = vld [vmem:[#allocation2 + $0x2] sm:$0x1]
    %199 = vrot.lane.b32.xlu0 %v197, 32
    %v200 = vpop.permute.xlu0 %199
    %202 = vst.msk [vmem:[#allocation3 + $0x8] sm:$0x1] %vm42, %v200
    %v203 = vld [vmem:[#allocation2 + $0x5] sm:$0x1]
    %205 = vrot.lane.b32.xlu0 %v203, 32
    %v206 = vpop.permute.xlu0 %205
    %208 = vst.msk [vmem:[#allocation3 + $0x9] sm:$0x1] %vm42, %v206
    %v209 = vld [vmem:[#allocation2 + $0x8] sm:$0x1]
    %211 = vrot.lane.b32.xlu0 %v209, 32
    %v212 = vpop.permute.xlu0 %211
    %214 = vst.msk [vmem:[#allocation3 + $0xa] sm:$0x1] %vm42, %v212
    %v215 = vld [vmem:[#allocation2 + $0xb] sm:$0x1]
    %217 = vrot.lane.b32.xlu0 %v215, 32
    %v218 = vpop.permute.xlu0 %217
    %220 = vst.msk [vmem:[#allocation3 + $0xb] sm:$0x1] %vm42, %v218
    %v221 = vld [vmem:[#allocation2 + $0xe] sm:$0x1]
    %223 = vrot.lane.b32.xlu0 %v221, 32
    %v224 = vpop.permute.xlu0 %223
    %226 = vst.msk [vmem:[#allocation3 + $0xc] sm:$0x1] %vm42, %v224
    %v227 = vld [vmem:[#allocation2 + $0x11] sm:$0x1]
    %229 = vrot.lane.b32.xlu0 %v227, 32
    %v230 = vpop.permute.xlu0 %229
    %232 = vst.msk [vmem:[#allocation3 + $0xd] sm:$0x1] %vm42, %v230
    %v233 = vld [vmem:[#allocation3] sm:$0xff]
    %v234 = vld [vmem:[#allocation3 + $0x8] sm:$0xff]
    %v235 = vld [vmem:[#allocation3 + $0x10] sm:$0xff]
    %v236 = vld [vmem:[#allocation3 + $0x18] sm:$0xff]
    %v237 = vld [vmem:[#allocation3 + $0x20] sm:$0xff]
    %v238 = vld [vmem:[#allocation3 + $0x28] sm:$0xff]
    %v239 = vld [vmem:[%s1] sm:$0xff]
    %v240 = vld [vmem:[%s1 + $0x8] sm:$0xff]
    %v241 = vld [vmem:[%s1 + $0x10] sm:$0xff]
    %v242 = vld [vmem:[%s1 + $0x18] sm:$0xff]
    %v243 = vld [vmem:[%s1 + $0x20] sm:$0xff]
    %v244 = vld [vmem:[%s1 + $0x28] sm:$0xff]
    %v245 = vld [vmem:[%s1 + $0x30] sm:$0xff]
    %v246 = vld [vmem:[%s1 + $0x38] sm:$0xff]
    %v247 = vld [vmem:[%s1 + $0x40] sm:$0xff]
    %v248 = vld [vmem:[%s1 + $0x48] sm:$0xff]
    %v249 = vld [vmem:[%s1 + $0x50] sm:$0xff]
    %v250 = vld [vmem:[%s1 + $0x58] sm:$0xff]
    %v251 = vld [vmem:[%s1 + $0x60] sm:$0xff]
    %v252 = vld [vmem:[%s1 + $0x68] sm:$0xff]
    %v253 = vld [vmem:[%s1 + $0x70] sm:$0xff]
    %v254 = vld [vmem:[%s1 + $0x78] sm:$0xff]
    %v255 = vld [vmem:[%s1 + $0x80] sm:$0xff]
    %v256 = vld [vmem:[%s1 + $0x88] sm:$0xff]
    %v257 = vld [vmem:[%s1 + $0x90] sm:$0xff]
    %v258 = vld [vmem:[%s1 + $0x98] sm:$0xff]
    %v259 = vld [vmem:[%s1 + $0xa0] sm:$0xff]
    %v260 = vld [vmem:[%s1 + $0xa8] sm:$0xff]
    %v261 = vld [vmem:[%s1 + $0xb0] sm:$0xff]
    %v262 = vld [vmem:[%s1 + $0xb8] sm:$0xff]
    %v263 = vld [vmem:[%s1 + $0xc0] sm:$0x1]
    %v264 = vlaneseq
    %v265 = vshrl.u32 %v264, 7
    %v266 = vsub.s32 0, %v265
    %v267 = vrot.slane %v263, %v266
    %v269 = vsel %vm20, %v234, 0
    %v272 = vsel %vm20, %v236, 0
    %v275 = vsel %vm20, %v238, 0
    %277 = vmatprep.subr.mxu0 0.0
    %278 = vmatpush1.msra.mxu0 %v239
    %279 = vmatprep.subr.mxu0 0.0
    %280 = vmatpush1.msra.mxu0 %v240
    %281 = vmatprep.subr.mxu0 0.0
    %282 = vmatpush1.msra.mxu0 %v241
    %283 = vmatprep.subr.mxu0 0.0
    %284 = vmatpush1.msra.mxu0 %v242
    %285 = vmatprep.subr.mxu0 0.0
    %286 = vmatpush1.msra.mxu0 %v243
    %287 = vmatprep.subr.mxu0 0.0
    %288 = vmatpush1.msra.mxu0 %v244
    %289 = vmatprep.subr.mxu0 0.0
    %290 = vmatpush1.msra.mxu0 %v245
    %291 = vmatprep.subr.mxu0 0.0
    %292 = vmatpush1.msra.mxu0 %v246
    %293 = vmatprep.subr.mxu0 0.0
    %294 = vmatpush1.msra.mxu0 %v247
    %295 = vmatprep.subr.mxu0 0.0
    %296 = vmatpush1.msra.mxu0 %v248
    %297 = vmatprep.subr.mxu0 0.0
    %298 = vmatpush1.msra.mxu0 %v249
    %299 = vmatprep.subr.mxu0 0.0
    %300 = vmatpush1.msra.mxu0 %v250
    %301 = vmatprep.subr.mxu0 0.0
    %302 = vmatpush1.msra.mxu0 %v251
    %303 = vmatprep.subr.mxu0 0.0
    %304 = vmatpush1.msra.mxu0 %v252
    %305 = vmatprep.subr.mxu0 0.0
    %306 = vmatpush1.msra.mxu0 %v253
    %307 = vmatprep.subr.mxu0 0.0
    %308 = vmatpush1.msra.mxu0 %v254
    %309 = vmatprep.subr.mxu0 0.0
    %310 = vmatpush1.msra.mxu0 %v255
    %311 = vmatprep.subr.mxu0 0.0
    %312 = vmatpush1.msra.mxu0 %v256
    %313 = vmatprep.subr.mxu0 0.0
    %314 = vmatpush1.msra.mxu0 %v257
    %315 = vmatprep.subr.mxu0 0.0
    %316 = vmatpush1.msra.mxu0 %v258
    %317 = vmatprep.subr.mxu0 0.0
    %318 = vmatpush1.msra.mxu0 %v259
    %319 = vmatprep.subr.mxu0 0.0
    %320 = vmatpush1.msra.mxu0 %v260
    %321 = vmatprep.subr.mxu0 0.0
    %322 = vmatpush1.msra.mxu0 %v261
    %323 = vmatprep.subr.mxu0 0.0
    %324 = vmatpush1.msra.mxu0 %v262
    %325 = vmatprep.subr.mxu0 0.0
    %326 = vmatpush1.msra.mxu0 0.0
    %327 = vmatprep.subr.mxu0 0.0
    %328 = vmatpush1.msra.mxu0 0.0
    %329 = vmatprep.subr.mxu0 0.0
    %330 = vmatpush1.msra.mxu0 0.0
    %331 = vmatprep.subr.mxu0 0.0
    %332 = vmatpush1.msra.mxu0 0.0
    %333 = vmatprep.subr.mxu0 0.0
    %334 = vmatpush1.msra.mxu0 0.0
    %335 = vmatprep.subr.mxu0 0.0
    %336 = vmatpush1.msra.mxu0 0.0
    %337 = vmatprep.subr.mxu0 0.0
    %338 = vmatpush1.msra.mxu0 0.0
    %339 = vmatprep.subr.mxu0 0.0
    %340 = vmatpush1.msra.mxu0 0.0
    %341 = vmatprep.mubr.f32.mxu0 %v269
    %342 = vmatmul.mubr.f32.gmra.mrb[0].mxu0 %v233
    %v343 = vpop.f32.mrb[0].mxu0
    %v344 = vadd.f32 %v267, %v343
    %v345 = vpop.f32.mrb[0].mxu0
    %346 = vmatprep.mubr.f32.mxu0 %v272
    %347 = vmatmul.mubr.f32.gmra.mrb[0].mxu0 %v235
    %v348 = vpop.f32.mrb[0].mxu0
    %v349 = vadd.f32 %v267, %v348
    %v350 = vpop.f32.mrb[0].mxu0
    %351 = vmatprep.mubr.f32.mxu0 %v275
    %352 = vmatmul.mubr.f32.gmra.mrb[0].mxu0 %v237
    %v353 = vpop.f32.mrb[0].mxu0
    %v354 = vadd.f32 %v267, %v353
    %v355 = vpop.f32.mrb[0].mxu0
    %356 = vdwg.mxu0
    %v357 = vmul.f32 %v344, 0.01
    %v358 = vmul.f32 %v349, 0.01
    %v359 = vmul.f32 %v354, 0.01
    %v360 = vmax.f32 %v344, %v357
    %v361 = vmax.f32 %v349, %v358
    %v362 = vmax.f32 %v354, %v359
    %v363 = vlaneseq
    %v364 = vshrl.u32 %v363, 7
    %v365 = vadd.s32 %v364, 8
    %v366 = vadd.s32 %v364, 16
    %v367 = vlaneseq
    %v368 = vand.u32 %v367, 127
    %vm369 = vcmp.lt.s32.totalorder %v368, 32
    %vm370 = vcmp.lt.s32.totalorder %v368, 64
    %v371 = vsel %vm370, 9, 6
    %v372 = vsel %vm369, 18, %v371
    %vm373 = vcmp.lt.s32.totalorder %v364, %v372
    %vm374 = vcmp.lt.s32.totalorder %v365, %v372
    %vm375 = vcmp.lt.s32.totalorder %v366, %v372
    %v376 = vsel %vm373, %v360, -inf
    %v377 = vsel %vm374, %v361, -inf
    %v378 = vsel %vm375, %v362, -inf
    %vm379 = vcmask 785408
    %v380 = vsel %vm379, %v376, -inf
    %v381 = vsel %vm379, %v377, -inf
    %v382 = vsel %vm379, %v378, -inf
    %v383 = vmax.f32 %v380, %v381
    %v384 = vmax.f32 %v383, %v382
    %v385 = vrot.slane %v384, 4
    %v386 = vmax.f32 %v384, %v385
    %v387 = vrot.slane %v386, 2
    %v388 = vmax.f32 %v386, %v387
    %v389 = vrot.slane %v388, 1
    %v390 = vmax.f32 %v388, %v389
    %v391 = vsel %vm370, 0.11111111, 0.16666667
    %v392 = vsel %vm369, 0.055555556, %v391
    %v393 = vsel %vm373, %v360, 0.0
    %v394 = vsel %vm374, %v361, 0.0
    %v395 = vsel %vm375, %v362, 0.0
    %v396 = vsel %vm379, %v393, 0.0
    %v397 = vsel %vm379, %v394, 0.0
    %v398 = vadd.f32 %v396, %v397
    %v399 = vsel %vm379, %v395, 0.0
    %v400 = vadd.f32 %v398, %v399
    %v401 = vrot.slane %v400, 4
    %v402 = vadd.f32 %v400, %v401
    %v403 = vrot.slane %v402, 2
    %v404 = vadd.f32 %v402, %v403
    %v405 = vrot.slane %v404, 1
    %v406 = vadd.f32 %v404, %v405
    %v407 = vmul.f32 %v406, %v392
    %409 = vrot.lane.b32.xlu0 %v407, 96
    %v410 = vpop.permute.xlu0 %409
    %v412 = vsel %vm379, %v390, %v410
    %v413 = vld [vmem:[%s2] sm:$0xff]
    %v414 = vld [vmem:[%s2 + $0x8] sm:$0xff]
    %v415 = vld [vmem:[%s2 + $0x10] sm:$0xff]
    %v416 = vld [vmem:[%s2 + $0x18] sm:$0xff]
    %v417 = vld [vmem:[%s2 + $0x20] sm:$0xff]
    %v418 = vld [vmem:[%s2 + $0x28] sm:$0xff]
    %v419 = vld [vmem:[%s2 + $0x30] sm:$0xff]
    %v420 = vld [vmem:[%s2 + $0x38] sm:$0xff]
    %v421 = vld [vmem:[%s2 + $0x40] sm:$0xff]
    %v422 = vld [vmem:[%s2 + $0x48] sm:$0xff]
    %v423 = vld [vmem:[%s2 + $0x50] sm:$0xff]
    %v424 = vld [vmem:[%s2 + $0x58] sm:$0xff]
    %v425 = vld [vmem:[%s2 + $0x60] sm:$0xff]
    %v426 = vld [vmem:[%s2 + $0x68] sm:$0xff]
    %v427 = vld [vmem:[%s2 + $0x70] sm:$0xff]
    %v428 = vld [vmem:[%s2 + $0x78] sm:$0xff]
    %v429 = vld [vmem:[%s2 + $0x80] sm:$0xff]
    %v430 = vld [vmem:[%s2 + $0x88] sm:$0xff]
    %v431 = vld [vmem:[%s2 + $0x90] sm:$0xff]
    %v432 = vld [vmem:[%s2 + $0x98] sm:$0xff]
    %v433 = vld [vmem:[%s2 + $0xa0] sm:$0xff]
    %v434 = vld [vmem:[%s2 + $0xa8] sm:$0xff]
    %v435 = vld [vmem:[%s2 + $0xb0] sm:$0xff]
    %v436 = vld [vmem:[%s2 + $0xb8] sm:$0xff]
    %v437 = vld [vmem:[%s2 + $0xc0] sm:$0x1]
    %v438 = vsel %vm20, %v410, 0
    %440 = vmatprep.subr.mxu0 0.0
    %441 = vmatpush1.msra.mxu0 %v413
    %442 = vmatprep.subr.mxu0 0.0
    %443 = vmatpush1.msra.mxu0 %v414
    %444 = vmatprep.subr.mxu0 0.0
    %445 = vmatpush1.msra.mxu0 %v415
    %446 = vmatprep.subr.mxu0 0.0
    %447 = vmatpush1.msra.mxu0 %v416
    %448 = vmatprep.subr.mxu0 0.0
    %449 = vmatpush1.msra.mxu0 %v417
    %450 = vmatprep.subr.mxu0 0.0
    %451 = vmatpush1.msra.mxu0 %v418
    %452 = vmatprep.subr.mxu0 0.0
    %453 = vmatpush1.msra.mxu0 %v419
    %454 = vmatprep.subr.mxu0 0.0
    %455 = vmatpush1.msra.mxu0 %v420
    %456 = vmatprep.subr.mxu0 0.0
    %457 = vmatpush1.msra.mxu0 %v421
    %458 = vmatprep.subr.mxu0 0.0
    %459 = vmatpush1.msra.mxu0 %v422
    %460 = vmatprep.subr.mxu0 0.0
    %461 = vmatpush1.msra.mxu0 %v423
    %462 = vmatprep.subr.mxu0 0.0
    %463 = vmatpush1.msra.mxu0 %v424
    %464 = vmatprep.subr.mxu0 0.0
    %465 = vmatpush1.msra.mxu0 %v425
    %466 = vmatprep.subr.mxu0 0.0
    %467 = vmatpush1.msra.mxu0 %v426
    %468 = vmatprep.subr.mxu0 0.0
    %469 = vmatpush1.msra.mxu0 %v427
    %470 = vmatprep.subr.mxu0 0.0
    %471 = vmatpush1.msra.mxu0 %v428
    %472 = vmatprep.subr.mxu0 0.0
    %473 = vmatpush1.msra.mxu0 %v429
    %474 = vmatprep.subr.mxu0 0.0
    %475 = vmatpush1.msra.mxu0 %v430
    %476 = vmatprep.subr.mxu0 0.0
    %477 = vmatpush1.msra.mxu0 %v431
    %478 = vmatprep.subr.mxu0 0.0
    %479 = vmatpush1.msra.mxu0 %v432
    %480 = vmatprep.subr.mxu0 0.0
    %481 = vmatpush1.msra.mxu0 %v433
    %482 = vmatprep.subr.mxu0 0.0
    %483 = vmatpush1.msra.mxu0 %v434
    %484 = vmatprep.subr.mxu0 0.0
    %485 = vmatpush1.msra.mxu0 %v435
    %486 = vmatprep.subr.mxu0 0.0
    %487 = vmatpush1.msra.mxu0 %v436
    %488 = vmatprep.subr.mxu0 0.0
    %489 = vmatpush1.msra.mxu0 0.0
    %490 = vmatprep.subr.mxu0 0.0
    %491 = vmatpush1.msra.mxu0 0.0
    %492 = vmatprep.subr.mxu0 0.0
    %493 = vmatpush1.msra.mxu0 0.0
    %494 = vmatprep.subr.mxu0 0.0
    %495 = vmatpush1.msra.mxu0 0.0
    %496 = vmatprep.subr.mxu0 0.0
    %497 = vmatpush1.msra.mxu0 0.0
    %498 = vmatprep.subr.mxu0 0.0
    %499 = vmatpush1.msra.mxu0 0.0
    %500 = vmatprep.subr.mxu0 0.0
    %501 = vmatpush1.msra.mxu0 0.0
    %502 = vmatprep.subr.mxu0 0.0
    %503 = vmatpush1.msra.mxu0 0.0
    %504 = vmatprep.mubr.f32.mxu0 %v438
    %505 = vmatmul.mubr.f32.gmra.mrb[0].mxu0 %v412
    %v506 = vpop.f32.mrb[0].mxu0
    %v507 = vadd.f32 %v437, %v506
    %v508 = vpop.f32.mrb[0].mxu0
    %509 = vdwg.mxu0
    %510 = vst [vmem:[#allocation4] sm:$0x1] %v507
    // Predicated region
    $region14: #{tpu_custom_call.1} parent=1 // pred_check
      _
    $region15: #{tpu_custom_call.1} parent=1 // pred_check_branch
      %512 = sbr.rel (0) target = $region17
    $region16: #{tpu_custom_call.1} parent=1 // pred_region
      %s514 = ssub.s32 16, 16
      %515 = vsyncadd [#allocation5], %s514
      %s517 = sshll.u32 [#allocation4], 4
      %s518 = int_to_ptr.vmem [resolvable:$true] %s517
      %520 = dma.vmem_to_hbm [thread:$0]  %s518, 16, %s3, [#allocation5]
    $region17: #{tpu_custom_call.1} parent=1 // pred_fallthru
      _
    // Predicated region
    $region18: #{tpu_custom_call.1} parent=1 // pred_check
      _
    $region19: #{tpu_custom_call.1} parent=1 // pred_check_branch
      %522 = sbr.rel (0) target = $region21
    $region20: #{tpu_custom_call.1} parent=1 // pred_region
      %523 = dma.done [#allocation5], 16
    $region21: #{tpu_custom_call.1} parent=1 // pred_fallthru
      _
    %524 = vsyncpa [#allocation5], 1

</llo_original>
